<compile_context>
chip_gen: v6e
topology: v6e:2x2x1
jax: 0.10.0
libtpu: 0.0.40
codegen_flags: <defaults>
</compile_context>

<pallas_src>
import jax
import jax.numpy as jnp
from jax.experimental import pallas as pl
from jax.experimental.pallas import tpu as pltpu

LANE = 128      # TPU lane width: embedding/output dim padded to this
SUBLANE = 8     # f32 sublane width: row tiles are multiples of this


def _round_up(x, m):
    return (x + m - 1) // m * m


# ---------------------------------------------------------------------------
# Pallas kernel: fused one-hot gather + masked mean pooling for all fields
# ---------------------------------------------------------------------------
def _dyemb_kernel(ids_ref, len_ref, table_ref, out_ref):
    """ids_ref   : (TR, L)  int32  global ids (field offset already added)
       len_ref   : (TR, 1)  int32  valid length per (batch, field) row
       table_ref : (Vp, Ep) f32    all field tables concatenated, zero-padded
       out_ref   : (TR, Ep) f32    pooled embeddings (lane-padded)"""
    ids = ids_ref[...]
    lens = len_ref[...]
    TR, L = ids.shape
    Vp = table_ref.shape[0]

    vocab_iota = jax.lax.broadcasted_iota(jnp.int32, (TR, Vp), 1)
    pos_valid = (jax.lax.broadcasted_iota(jnp.int32, (TR, L), 1)
                 < lens).astype(jnp.float32)                      # (TR, L)

    # count[r, v] = number of valid positions l with ids[r, l] == v
    count = jnp.zeros((TR, Vp), jnp.float32)
    for l in range(L):                        # L is a small static constant
        onehot = (ids[:, l:l + 1] == vocab_iota).astype(jnp.float32)
        count = count + onehot * pos_valid[:, l:l + 1]

    # one MXU matmul performs the gather + sum over positions for every field
    pooled = jnp.dot(count, table_ref[...], preferred_element_type=jnp.float32)

    denom = jnp.maximum(lens, 1).astype(jnp.float32)              # (TR, 1)
    out_ref[...] = pooled / denom


def dyemb_pooling(ids_global, lengths, table, *, max_tile_rows=512):
    """ids_global: (R, L) int32, lengths: (R, 1) int32, table: (Vp, Ep) f32."""
    R, L = ids_global.shape
    Vp, Ep = table.shape

    TR = min(max_tile_rows, _round_up(R, SUBLANE))
    Rp = _round_up(R, TR)
    if Rp != R:                                # pad rows; padded rows have len=0
        ids_global = jnp.pad(ids_global, ((0, Rp - R), (0, 0)))
        lengths = jnp.pad(lengths, ((0, Rp - R), (0, 0)))

    cost = pl.CostEstimate(
        flops=2 * Rp * Vp * Ep,
        transcendentals=0,
        bytes_accessed=4 * (Rp * L + Rp + Vp * Ep + Rp * Ep),
    )

    out = pl.pallas_call(
        _dyemb_kernel,
        out_shape=jax.ShapeDtypeStruct((Rp, Ep), jnp.float32),
        grid=(Rp // TR,),
        in_specs=[
            pl.BlockSpec((TR, L), lambda i: (i, 0)),
            pl.BlockSpec((TR, 1), lambda i: (i, 0)),
            pl.BlockSpec((Vp, Ep), lambda i: (0, 0)),   # table VMEM-resident
        ],
        out_specs=pl.BlockSpec((TR, Ep), lambda i: (i, 0)),
        compiler_params=pltpu.CompilerParams(
            dimension_semantics=("parallel",)),
        cost_estimate=cost,
    )(ids_global, lengths, table)
    return out[:R]


# ---------------------------------------------------------------------------
# Module wrapper (parameter setup / reshaping in plain JAX)
# ---------------------------------------------------------------------------
class DyEmbPallas:
    def __init__(self, fnames, max_idxs, embedding_size=4, *, key):
        self.fnames = list(fnames)
        self.embedding_size = embedding_size
        vocab_sizes = [int(max_idxs[name]) + 1 for name in self.fnames]
        self.num_fields = len(self.fnames)

        # per-field tables, nn.Embedding default init ~ N(0, 1)
        tables = []
        for v in vocab_sizes:
            key, sub = jax.random.split(key)
            tables.append(jax.random.normal(sub, (v, embedding_size), jnp.float32))
        self.tables = tables

        # concatenate all field tables into one padded (Vp, 128) slab
        offsets, off = [], 0
        for v in vocab_sizes:
            offsets.append(off)
            off += v
        self.offsets = offsets
        total_v = off

        vp = _round_up(total_v, LANE)
        big = jnp.zeros((vp, LANE), jnp.float32)
        big = big.at[:total_v, :embedding_size].set(jnp.concatenate(tables, axis=0))
        self.table = big

    def __call__(self, dynamic_ids, dynamic_lengths):
        B = dynamic_ids[self.fnames[0]].shape[0]
        F = self.num_fields
        L = max(dynamic_ids[name].shape[1] for name in self.fnames)

        ids_rows, len_rows = [], []
        for i, name in enumerate(self.fnames):
            ids = jnp.asarray(dynamic_ids[name], jnp.int32)
            if ids.shape[1] < L:
                ids = jnp.pad(ids, ((0, 0), (0, L - ids.shape[1])))
            ids_rows.append(ids + self.offsets[i])
            len_rows.append(jnp.asarray(dynamic_lengths[name + "_length"], jnp.int32))

        ids_global = jnp.stack(ids_rows, axis=1).reshape(B * F, L)
        lengths = jnp.stack(len_rows, axis=1).reshape(B * F, 1)

        pooled = dyemb_pooling(ids_global, lengths, self.table)      # (B*F, 128)
        return pooled[:, :self.embedding_size].reshape(B, F, self.embedding_size)

    # pure-JAX reference for correctness checking
    def reference(self, dynamic_ids, dynamic_lengths):
        outs = []
        for i, name in enumerate(self.fnames):
            ids = jnp.asarray(dynamic_ids[name], jnp.int32)          # (B, L_i)
            lens = jnp.asarray(dynamic_lengths[name + "_length"], jnp.int32)
            emb = self.tables[i][ids]                                # (B, L_i, E)
            mask = (jnp.arange(ids.shape[1])[None, :] < lens[:, None]).astype(jnp.float32)
            emb = emb * mask[:, :, None]
            denom = jnp.maximum(lens, 1).astype(jnp.float32)
            pooled = emb.sum(axis=1) / denom[:, None]
            outs.append(pooled[:, None, :])
        return jnp.concatenate(outs, axis=1)                         # (B, F, E)


# ---------------------------------------------------------------------------
if __name__ == "__main__":
    key = jax.random.PRNGKey(0)
    key, k_model = jax.random.split(key)

    fnames = ["f0", "f1", "f2"]
    max_idxs = {"f0": 10, "f1": 6, "f2": 12}
    embedding_size = 4
    batch = 8
    max_feature_size = 5

    model = DyEmbPallas(fnames, max_idxs, embedding_size, key=k_model)

    dynamic_ids, dynamic_lengths = {}, {}
    for name in fnames:
        key, k_id, k_len = jax.random.split(key, 3)
        dynamic_ids[name] = jax.random.randint(
            k_id, (batch, max_feature_size), 0, max_idxs[name] + 1, jnp.int32)
        dynamic_lengths[name + "_length"] = jax.random.randint(
            k_len, (batch,), 0, max_feature_size + 1, jnp.int32)

    out = model(dynamic_ids, dynamic_lengths)
    out = jax.block_until_ready(out)

    ref = model.reference(dynamic_ids, dynamic_lengths)
    assert out.shape == (batch, len(fnames), embedding_size), out.shape
    err = jnp.max(jnp.abs(out - ref))
    assert jnp.allclose(out, ref, atol=1e-5, rtol=1e-5), f"max err {err}"

    print("KERNEL_OK")
</pallas_src>

<mosaic_0001>
module attributes {stable_mosaic.version = 11 : i64} {
  func.func @_dyemb_kernel(%arg0: i32, %arg1: memref<24x5xi32, #tpu.memory_space<vmem>>, %arg2: memref<24x1xi32, #tpu.memory_space<vmem>>, %arg3: memref<128x128xf32, #tpu.memory_space<vmem>>, %arg4: memref<24x128xf32, #tpu.memory_space<vmem>>) attributes {dimension_semantics = [#tpu.dimension_semantics<parallel>], iteration_bounds = array<i64: 1>, scalar_prefetch = 0 : i64, scratch_operands = 0 : i64, tpu.core_type = #tpu.core_type<tc>, window_params = [{transform_indices = @transform_0, window_bounds = array<i64: 24, 5>}, {transform_indices = @transform_1, window_bounds = array<i64: 24, 1>}, {pipeline_mode = #tpu.pipeline_mode<synchronous>, transform_indices = @transform_2, window_bounds = array<i64: 128, 128>}, {transform_indices = @transform_3, window_bounds = array<i64: 24, 128>}]} {
    %c0 = arith.constant 0 : index
    %c0_0 = arith.constant 0 : index
    %0 = vector.load %arg1[%c0, %c0_0] : memref<24x5xi32, #tpu.memory_space<vmem>>, vector<24x5xi32>
    %c0_1 = arith.constant 0 : index
    %c0_2 = arith.constant 0 : index
    %1 = vector.load %arg2[%c0_1, %c0_2] : memref<24x1xi32, #tpu.memory_space<vmem>>, vector<24x1xi32>
    %2 = tpu.iota {dimensions = array<i32: 1>} : vector<24x128xi32>
    %3 = tpu.iota {dimensions = array<i32: 1>} : vector<24x5xi32>
    %4 = vector.broadcast %1 : vector<24x1xi32> to vector<24x5xi32>
    %5 = arith.cmpi slt, %3, %4 : vector<24x5xi32>
    %6 = arith.extui %5 : vector<24x5xi1> to vector<24x5xi32>
    %7 = arith.sitofp %6 : vector<24x5xi32> to vector<24x5xf32>
    %cst = arith.constant 0.000000e+00 : f32
    %8 = vector.broadcast %cst : f32 to vector<24x128xf32>
    %9 = vector.extract_strided_slice %0 {offsets = [0, 0], sizes = [24, 1], strides = [1, 1]} : vector<24x5xi32> to vector<24x1xi32>
    %10 = vector.broadcast %9 : vector<24x1xi32> to vector<24x128xi32>
    %11 = arith.cmpi eq, %10, %2 : vector<24x128xi32>
    %12 = arith.extui %11 : vector<24x128xi1> to vector<24x128xi32>
    %13 = arith.sitofp %12 : vector<24x128xi32> to vector<24x128xf32>
    %14 = vector.extract_strided_slice %7 {offsets = [0, 0], sizes = [24, 1], strides = [1, 1]} : vector<24x5xf32> to vector<24x1xf32>
    %15 = vector.broadcast %14 : vector<24x1xf32> to vector<24x128xf32>
    %16 = arith.mulf %13, %15 : vector<24x128xf32>
    %17 = arith.addf %8, %16 : vector<24x128xf32>
    %18 = vector.extract_strided_slice %0 {offsets = [0, 1], sizes = [24, 1], strides = [1, 1]} : vector<24x5xi32> to vector<24x1xi32>
    %19 = vector.broadcast %18 : vector<24x1xi32> to vector<24x128xi32>
    %20 = arith.cmpi eq, %19, %2 : vector<24x128xi32>
    %21 = arith.extui %20 : vector<24x128xi1> to vector<24x128xi32>
    %22 = arith.sitofp %21 : vector<24x128xi32> to vector<24x128xf32>
    %23 = vector.extract_strided_slice %7 {offsets = [0, 1], sizes = [24, 1], strides = [1, 1]} : vector<24x5xf32> to vector<24x1xf32>
    %24 = vector.broadcast %23 : vector<24x1xf32> to vector<24x128xf32>
    %25 = arith.mulf %22, %24 : vector<24x128xf32>
    %26 = arith.addf %17, %25 : vector<24x128xf32>
    %27 = vector.extract_strided_slice %0 {offsets = [0, 2], sizes = [24, 1], strides = [1, 1]} : vector<24x5xi32> to vector<24x1xi32>
    %28 = vector.broadcast %27 : vector<24x1xi32> to vector<24x128xi32>
    %29 = arith.cmpi eq, %28, %2 : vector<24x128xi32>
    %30 = arith.extui %29 : vector<24x128xi1> to vector<24x128xi32>
    %31 = arith.sitofp %30 : vector<24x128xi32> to vector<24x128xf32>
    %32 = vector.extract_strided_slice %7 {offsets = [0, 2], sizes = [24, 1], strides = [1, 1]} : vector<24x5xf32> to vector<24x1xf32>
    %33 = vector.broadcast %32 : vector<24x1xf32> to vector<24x128xf32>
    %34 = arith.mulf %31, %33 : vector<24x128xf32>
    %35 = arith.addf %26, %34 : vector<24x128xf32>
    %36 = vector.extract_strided_slice %0 {offsets = [0, 3], sizes = [24, 1], strides = [1, 1]} : vector<24x5xi32> to vector<24x1xi32>
    %37 = vector.broadcast %36 : vector<24x1xi32> to vector<24x128xi32>
    %38 = arith.cmpi eq, %37, %2 : vector<24x128xi32>
    %39 = arith.extui %38 : vector<24x128xi1> to vector<24x128xi32>
    %40 = arith.sitofp %39 : vector<24x128xi32> to vector<24x128xf32>
    %41 = vector.extract_strided_slice %7 {offsets = [0, 3], sizes = [24, 1], strides = [1, 1]} : vector<24x5xf32> to vector<24x1xf32>
    %42 = vector.broadcast %41 : vector<24x1xf32> to vector<24x128xf32>
    %43 = arith.mulf %40, %42 : vector<24x128xf32>
    %44 = arith.addf %35, %43 : vector<24x128xf32>
    %45 = vector.extract_strided_slice %0 {offsets = [0, 4], sizes = [24, 1], strides = [1, 1]} : vector<24x5xi32> to vector<24x1xi32>
    %46 = vector.broadcast %45 : vector<24x1xi32> to vector<24x128xi32>
    %47 = arith.cmpi eq, %46, %2 : vector<24x128xi32>
    %48 = arith.extui %47 : vector<24x128xi1> to vector<24x128xi32>
    %49 = arith.sitofp %48 : vector<24x128xi32> to vector<24x128xf32>
    %50 = vector.extract_strided_slice %7 {offsets = [0, 4], sizes = [24, 1], strides = [1, 1]} : vector<24x5xf32> to vector<24x1xf32>
    %51 = vector.broadcast %50 : vector<24x1xf32> to vector<24x128xf32>
    %52 = arith.mulf %49, %51 : vector<24x128xf32>
    %53 = arith.addf %44, %52 : vector<24x128xf32>
    %c0_3 = arith.constant 0 : index
    %c0_4 = arith.constant 0 : index
    %54 = vector.load %arg3[%c0_3, %c0_4] : memref<128x128xf32, #tpu.memory_space<vmem>>, vector<128x128xf32>
    %cst_5 = arith.constant dense<0.000000e+00> : vector<24x128xf32>
    %55 = tpu.matmul %53, %54, %cst_5 {dimension_numbers = #tpu.dot_dimension_numbers<[1], [0], [0], [1], [0, 0, 1, 1], [], []>} : vector<24x128xf32>, vector<128x128xf32>, vector<24x128xf32> -> vector<24x128xf32>
    %c1_i32 = arith.constant 1 : i32
    %56 = vector.broadcast %c1_i32 : i32 to vector<24x1xi32>
    %57 = arith.maxsi %1, %56 : vector<24x1xi32>
    %58 = arith.sitofp %57 : vector<24x1xi32> to vector<24x1xf32>
    %59 = vector.broadcast %58 : vector<24x1xf32> to vector<24x128xf32>
    %60 = arith.divf %55, %59 : vector<24x128xf32>
    %c0_6 = arith.constant 0 : index
    %c0_7 = arith.constant 0 : index
    %61 = vector.load %arg4[%c0_6, %c0_7] : memref<24x128xf32, #tpu.memory_space<vmem>>, vector<24x128xf32>
    tpu.vector_store %arg4[%c0_6, %c0_7], %60 {strides = array<i32>} : memref<24x128xf32, #tpu.memory_space<vmem>>, vector<24x128xf32>,
    return
  }
  func.func @transform_0(%arg0: i32) -> (i32, i32) {
    %c0_i32 = arith.constant 0 : i32
    %c0_i32_0 = arith.constant 0 : i32
    return %arg0, %c0_i32 : i32, i32
  }
  func.func @transform_1(%arg0: i32) -> (i32, i32) {
    %c0_i32 = arith.constant 0 : i32
    %c0_i32_0 = arith.constant 0 : i32
    return %arg0, %c0_i32 : i32, i32
  }
  func.func @transform_2(%arg0: i32) -> (i32, i32) {
    %c0_i32 = arith.constant 0 : i32
    %c0_i32_0 = arith.constant 0 : i32
    %c0_i32_1 = arith.constant 0 : i32
    return %c0_i32, %c0_i32_0 : i32, i32
  }
  func.func @transform_3(%arg0: i32) -> (i32, i32) {
    %c0_i32 = arith.constant 0 : i32
    %c0_i32_0 = arith.constant 0 : i32
    return %arg0, %c0_i32 : i32, i32
  }
}

</mosaic_0001>

<llo_original>
// kernel: tpu_custom_call.1
$region0: #{tpu_custom_call.1}
  #allocation0 [shape = 'u32[]', space=smem, size = 0x4, offset = 0x4, fixed_abs, tag = 'smem constant byte address 0x4 - core index']
  #allocation1 [shape = 'u32[144,128]{1,0:T(1,128)}', space=vmem, size = 0x12000, scoped, tag = 'internal scratch']
  %s0 = inlined_call_operand.vmem [shape: s32[24,5], index: 0, kind: input, shape index: {}]
  %s1 = inlined_call_operand.vmem [shape: s32[24,1], index: 1, kind: input, shape index: {}]
  %s2 = inlined_call_operand.hbm [shape: f32[128,128], index: 2, kind: input, shape index: {}]
  %s3 = inlined_call_operand.hbm [shape: f32[24,128], index: 3, kind: output, shape index: {}]
  %s4 = sld [smem:[#allocation0]]
  $region26: #{tpu_custom_call.1} parent=0
    _
  %s6 = ssub.s32 1, %s4
  %s7 = scalar_select 0, %s6, %s4
  $region1: #{tpu_custom_call.1} parent=0
    #allocation2 [shape = 'u8[65536]{0}', space=vmem, size = 0x10000, scoped, tag = 'input window, operand 2, single buffered']
    #allocation3 [shape = 's32[1]{0}', space=sflag, size = 0x4, scoped, tag = 'scoped memory for tpu_custom_call.1']
    #allocation4 [shape = 's32[1]{0}', space=sflag, size = 0x4, scoped, tag = 'scoped memory for tpu_custom_call.1']
    #allocation5 [shape = 'u8[12288]{0}', space=vmem, size = 0x3000, scoped, tag = 'output window, operand 0, single buffered']
    %8 = vsyncpa [#allocation3], 0
    %9 = vsyncpa [#allocation4], 0
    // Predicated region
    $region2: #{tpu_custom_call.1} parent=1 // pred_check
      _
    $region3: #{tpu_custom_call.1} parent=1 // pred_check_branch
      %11 = sbr.rel (0) target = $region5
    $region4: #{tpu_custom_call.1} parent=1 // pred_region
      _
    $region5: #{tpu_custom_call.1} parent=1 // pred_fallthru
      _
    // Predicated region
    $region6: #{tpu_custom_call.1} parent=1 // pred_check
      _
    $region7: #{tpu_custom_call.1} parent=1 // pred_check_branch
      %13 = sbr.rel (0) target = $region9
    $region8: #{tpu_custom_call.1} parent=1 // pred_region
      _
    $region9: #{tpu_custom_call.1} parent=1 // pred_fallthru
      _
    // Predicated region
    $region10: #{tpu_custom_call.1} parent=1 // pred_check
      _
    $region11: #{tpu_custom_call.1} parent=1 // pred_check_branch
      %15 = sbr.rel (0) target = $region13
    $region12: #{tpu_custom_call.1} parent=1 // pred_region
      %s17 = ssub.s32 2048, 2048
      %18 = vsyncadd [#allocation3], %s17
      %s19 = sshll.u32 [#allocation2], 4
      %s20 = int_to_ptr.vmem [resolvable:$true] %s19
      %25 = dma.hbm_to_vmem [thread:$0]  %s2, 2048, %s20, [#allocation3], 128, 128, 8
    $region13: #{tpu_custom_call.1} parent=1 // pred_fallthru
      _
    // Predicated region
    $region14: #{tpu_custom_call.1} parent=1 // pred_check
      _
    $region15: #{tpu_custom_call.1} parent=1 // pred_check_branch
      %27 = sbr.rel (0) target = $region17
    $region16: #{tpu_custom_call.1} parent=1 // pred_region
      %28 = dma.done [#allocation3], 2048
    $region17: #{tpu_custom_call.1} parent=1 // pred_fallthru
      _
    %v29 = vld [vmem:[%s0] sm:$0xff]
    %v30 = vld [vmem:[%s0 + $0x8] sm:$0xff]
    %v31 = vld [vmem:[%s0 + $0x10] sm:$0xff]
    %v32 = vld [vmem:[%s1] sm:$0xff]
    %v33 = vld [vmem:[%s1 + $0x8] sm:$0xff]
    %v34 = vld [vmem:[%s1 + $0x10] sm:$0xff]
    %v35 = vlaneseq
    %v36 = vand.u32 %v35, 127
    %37 = vset.pattern.permute.xlu0 0
    %38 = vperm.xlu0 %37, %v32
    %v39 = vpop.permute.xlu0 %38
    %40 = vset.pattern.permute.xlu0 0
    %41 = vperm.xlu0 %40, %v33
    %v42 = vpop.permute.xlu0 %41
    %43 = vset.pattern.permute.xlu0 0
    %44 = vperm.xlu0 %43, %v34
    %v45 = vpop.permute.xlu0 %44
    %vm46 = vcmp.lt.s32.totalorder %v36, %v39
    %vm47 = vcmp.lt.s32.totalorder %v36, %v42
    %vm48 = vcmp.lt.s32.totalorder %v36, %v45
    %v49 = vsel %vm46, 1, 0
    %v50 = vsel %vm47, 1, 0
    %v51 = vsel %vm48, 1, 0
    %v52 = vcvt.s32.f32 %v49
    %v53 = vcvt.s32.f32 %v50
    %v54 = vcvt.s32.f32 %v51
    %55 = vset.pattern.permute.xlu0 0
    %56 = vperm.xlu0 %55, %v29
    %v57 = vpop.permute.xlu0 %56
    %58 = vset.pattern.permute.xlu0 0
    %59 = vperm.xlu0 %58, %v30
    %v60 = vpop.permute.xlu0 %59
    %61 = vset.pattern.permute.xlu0 0
    %62 = vperm.xlu0 %61, %v31
    %v63 = vpop.permute.xlu0 %62
    %vm64 = vcmp.eq.s32.totalorder %v57, %v36
    %vm65 = vcmp.eq.s32.totalorder %v60, %v36
    %vm66 = vcmp.eq.s32.totalorder %v63, %v36
    %v67 = vsel %vm64, 1, 0
    %v68 = vsel %vm65, 1, 0
    %v69 = vsel %vm66, 1, 0
    %v70 = vcvt.s32.f32 %v67
    %v71 = vcvt.s32.f32 %v68
    %v72 = vcvt.s32.f32 %v69
    %74 = vset.pattern.permute.xlu0 0
    %75 = vperm.xlu0 %74, %v52
    %v76 = vpop.permute.xlu0 %75
    %79 = vset.pattern.permute.xlu0 0
    %80 = vperm.xlu0 %79, %v53
    %v81 = vpop.permute.xlu0 %80
    %84 = vset.pattern.permute.xlu0 0
    %85 = vperm.xlu0 %84, %v54
    %v86 = vpop.permute.xlu0 %85
    %v88 = vmul.f32 %v70, %v76
    %v89 = vmul.f32 %v71, %v81
    %v90 = vmul.f32 %v72, %v86
    %v91 = vadd.f32 %v88, 0.0
    %v92 = vadd.f32 %v89, 0.0
    %v93 = vadd.f32 %v90, 0.0
    %94 = vset.pattern.permute.xlu0 1
    %95 = vperm.xlu0 %94, %v29
    %v96 = vpop.permute.xlu0 %95
    %97 = vset.pattern.permute.xlu0 1
    %98 = vperm.xlu0 %97, %v30
    %v99 = vpop.permute.xlu0 %98
    %100 = vset.pattern.permute.xlu0 1
    %101 = vperm.xlu0 %100, %v31
    %v102 = vpop.permute.xlu0 %101
    %vm103 = vcmp.eq.s32.totalorder %v96, %v36
    %vm104 = vcmp.eq.s32.totalorder %v99, %v36
    %vm105 = vcmp.eq.s32.totalorder %v102, %v36
    %v106 = vsel %vm103, 1, 0
    %v107 = vsel %vm104, 1, 0
    %v108 = vsel %vm105, 1, 0
    %v109 = vcvt.s32.f32 %v106
    %v110 = vcvt.s32.f32 %v107
    %v111 = vcvt.s32.f32 %v108
    %112 = vset.pattern.permute.xlu0 1
    %113 = vperm.xlu0 %112, %v52
    %v114 = vpop.permute.xlu0 %113
    %116 = vset.pattern.permute.xlu0 1
    %117 = vperm.xlu0 %116, %v53
    %v118 = vpop.permute.xlu0 %117
    %120 = vset.pattern.permute.xlu0 1
    %121 = vperm.xlu0 %120, %v54
    %v122 = vpop.permute.xlu0 %121
    %v124 = vmul.f32 %v109, %v114
    %v125 = vmul.f32 %v110, %v118
    %v126 = vmul.f32 %v111, %v122
    %v127 = vadd.f32 %v91, %v124
    %v128 = vadd.f32 %v92, %v125
    %v129 = vadd.f32 %v93, %v126
    %130 = vset.pattern.permute.xlu0 2
    %131 = vperm.xlu0 %130, %v29
    %v132 = vpop.permute.xlu0 %131
    %133 = vset.pattern.permute.xlu0 2
    %134 = vperm.xlu0 %133, %v30
    %v135 = vpop.permute.xlu0 %134
    %136 = vset.pattern.permute.xlu0 2
    %137 = vperm.xlu0 %136, %v31
    %v138 = vpop.permute.xlu0 %137
    %vm139 = vcmp.eq.s32.totalorder %v132, %v36
    %vm140 = vcmp.eq.s32.totalorder %v135, %v36
    %vm141 = vcmp.eq.s32.totalorder %v138, %v36
    %v142 = vsel %vm139, 1, 0
    %v143 = vsel %vm140, 1, 0
    %v144 = vsel %vm141, 1, 0
    %v145 = vcvt.s32.f32 %v142
    %v146 = vcvt.s32.f32 %v143
    %v147 = vcvt.s32.f32 %v144
    %148 = vset.pattern.permute.xlu0 2
    %149 = vperm.xlu0 %148, %v52
    %v150 = vpop.permute.xlu0 %149
    %152 = vset.pattern.permute.xlu0 2
    %153 = vperm.xlu0 %152, %v53
    %v154 = vpop.permute.xlu0 %153
    %156 = vset.pattern.permute.xlu0 2
    %157 = vperm.xlu0 %156, %v54
    %v158 = vpop.permute.xlu0 %157
    %v160 = vmul.f32 %v145, %v150
    %v161 = vmul.f32 %v146, %v154
    %v162 = vmul.f32 %v147, %v158
    %v163 = vadd.f32 %v127, %v160
    %v164 = vadd.f32 %v128, %v161
    %v165 = vadd.f32 %v129, %v162
    %166 = vset.pattern.permute.xlu0 3
    %167 = vperm.xlu0 %166, %v29
    %v168 = vpop.permute.xlu0 %167
    %169 = vset.pattern.permute.xlu0 3
    %170 = vperm.xlu0 %169, %v30
    %v171 = vpop.permute.xlu0 %170
    %172 = vset.pattern.permute.xlu0 3
    %173 = vperm.xlu0 %172, %v31
    %v174 = vpop.permute.xlu0 %173
    %vm175 = vcmp.eq.s32.totalorder %v168, %v36
    %vm176 = vcmp.eq.s32.totalorder %v171, %v36
    %vm177 = vcmp.eq.s32.totalorder %v174, %v36
    %v178 = vsel %vm175, 1, 0
    %v179 = vsel %vm176, 1, 0
    %v180 = vsel %vm177, 1, 0
    %v181 = vcvt.s32.f32 %v178
    %v182 = vcvt.s32.f32 %v179
    %v183 = vcvt.s32.f32 %v180
    %184 = vset.pattern.permute.xlu0 3
    %185 = vperm.xlu0 %184, %v52
    %v186 = vpop.permute.xlu0 %185
    %188 = vset.pattern.permute.xlu0 3
    %189 = vperm.xlu0 %188, %v53
    %v190 = vpop.permute.xlu0 %189
    %192 = vset.pattern.permute.xlu0 3
    %193 = vperm.xlu0 %192, %v54
    %v194 = vpop.permute.xlu0 %193
    %v196 = vmul.f32 %v181, %v186
    %v197 = vmul.f32 %v182, %v190
    %v198 = vmul.f32 %v183, %v194
    %v199 = vadd.f32 %v163, %v196
    %v200 = vadd.f32 %v164, %v197
    %v201 = vadd.f32 %v165, %v198
    %202 = vset.pattern.permute.xlu0 4
    %203 = vperm.xlu0 %202, %v29
    %v204 = vpop.permute.xlu0 %203
    %205 = vset.pattern.permute.xlu0 4
    %206 = vperm.xlu0 %205, %v30
    %v207 = vpop.permute.xlu0 %206
    %208 = vset.pattern.permute.xlu0 4
    %209 = vperm.xlu0 %208, %v31
    %v210 = vpop.permute.xlu0 %209
    %vm211 = vcmp.eq.s32.totalorder %v204, %v36
    %vm212 = vcmp.eq.s32.totalorder %v207, %v36
    %vm213 = vcmp.eq.s32.totalorder %v210, %v36
    %v214 = vsel %vm211, 1, 0
    %v215 = vsel %vm212, 1, 0
    %v216 = vsel %vm213, 1, 0
    %v217 = vcvt.s32.f32 %v214
    %v218 = vcvt.s32.f32 %v215
    %v219 = vcvt.s32.f32 %v216
    %220 = vset.pattern.permute.xlu0 4
    %221 = vperm.xlu0 %220, %v52
    %v222 = vpop.permute.xlu0 %221
    %224 = vset.pattern.permute.xlu0 4
    %225 = vperm.xlu0 %224, %v53
    %v226 = vpop.permute.xlu0 %225
    %228 = vset.pattern.permute.xlu0 4
    %229 = vperm.xlu0 %228, %v54
    %v230 = vpop.permute.xlu0 %229
    %v232 = vmul.f32 %v217, %v222
    %v233 = vmul.f32 %v218, %v226
    %v234 = vmul.f32 %v219, %v230
    %v235 = vadd.f32 %v199, %v232
    %v236 = vadd.f32 %v200, %v233
    %v237 = vadd.f32 %v201, %v234
    %v238 = vld [vmem:[#allocation2] sm:$0xff]
    %v239 = vld [vmem:[#allocation2 + $0x8] sm:$0xff]
    %v240 = vld [vmem:[#allocation2 + $0x10] sm:$0xff]
    %v241 = vld [vmem:[#allocation2 + $0x18] sm:$0xff]
    %v242 = vld [vmem:[#allocation2 + $0x20] sm:$0xff]
    %v243 = vld [vmem:[#allocation2 + $0x28] sm:$0xff]
    %v244 = vld [vmem:[#allocation2 + $0x30] sm:$0xff]
    %v245 = vld [vmem:[#allocation2 + $0x38] sm:$0xff]
    %v246 = vld [vmem:[#allocation2 + $0x40] sm:$0xff]
    %v247 = vld [vmem:[#allocation2 + $0x48] sm:$0xff]
    %v248 = vld [vmem:[#allocation2 + $0x50] sm:$0xff]
    %v249 = vld [vmem:[#allocation2 + $0x58] sm:$0xff]
    %v250 = vld [vmem:[#allocation2 + $0x60] sm:$0xff]
    %v251 = vld [vmem:[#allocation2 + $0x68] sm:$0xff]
    %v252 = vld [vmem:[#allocation2 + $0x70] sm:$0xff]
    %v253 = vld [vmem:[#allocation2 + $0x78] sm:$0xff]
    %254 = vmatprep.subr.mxu0 0.0
    %255 = vmatpush1.msra.mxu0 %v253
    %256 = vmatprep.subr.mxu0 0.0
    %257 = vmatpush1.msra.mxu0 %v252
    %258 = vmatprep.subr.mxu0 0.0
    %259 = vmatpush1.msra.mxu0 %v251
    %260 = vmatprep.subr.mxu0 0.0
    %261 = vmatpush1.msra.mxu0 %v250
    %262 = vmatprep.subr.mxu0 0.0
    %263 = vmatpush1.msra.mxu0 %v249
    %264 = vmatprep.subr.mxu0 0.0
    %265 = vmatpush1.msra.mxu0 %v248
    %266 = vmatprep.subr.mxu0 0.0
    %267 = vmatpush1.msra.mxu0 %v247
    %268 = vmatprep.subr.mxu0 0.0
    %269 = vmatpush1.msra.mxu0 %v246
    %270 = vmatprep.subr.mxu0 0.0
    %271 = vmatpush1.msra.mxu0 %v245
    %272 = vmatprep.subr.mxu0 0.0
    %273 = vmatpush1.msra.mxu0 %v244
    %274 = vmatprep.subr.mxu0 0.0
    %275 = vmatpush1.msra.mxu0 %v243
    %276 = vmatprep.subr.mxu0 0.0
    %277 = vmatpush1.msra.mxu0 %v242
    %278 = vmatprep.subr.mxu0 0.0
    %279 = vmatpush1.msra.mxu0 %v241
    %280 = vmatprep.subr.mxu0 0.0
    %281 = vmatpush1.msra.mxu0 %v240
    %282 = vmatprep.subr.mxu0 0.0
    %283 = vmatpush1.msra.mxu0 %v239
    %284 = vmatprep.subr.mxu0 0.0
    %285 = vmatpush1.msra.mxu0 %v238
    %286 = vmatprep.subr.mxu0 0.0
    %287 = vmatpush2.msra.mxu0 0.0
    %288 = vmatprep.subr.mxu0 0.0
    %289 = vmatpush2.msra.mxu0 0.0
    %290 = vmatprep.subr.mxu0 0.0
    %291 = vmatpush2.msra.mxu0 0.0
    %292 = vmatprep.subr.mxu0 0.0
    %293 = vmatpush2.msra.mxu0 0.0
    %294 = vmatprep.subr.mxu0 0.0
    %295 = vmatpush2.msra.mxu0 0.0
    %296 = vmatprep.subr.mxu0 0.0
    %297 = vmatpush2.msra.mxu0 0.0
    %298 = vmatprep.subr.mxu0 0.0
    %299 = vmatpush2.msra.mxu0 0.0
    %300 = vmatprep.subr.mxu0 0.0
    %301 = vmatpush2.msra.mxu0 0.0
    %302 = vmatprep.subr.mxu0 0.0
    %303 = vmatpush2.msra.mxu0 0.0
    %304 = vmatprep.subr.mxu0 0.0
    %305 = vmatpush2.msra.mxu0 0.0
    %306 = vmatprep.subr.mxu0 0.0
    %307 = vmatpush2.msra.mxu0 0.0
    %308 = vmatprep.subr.mxu0 0.0
    %309 = vmatpush2.msra.mxu0 0.0
    %310 = vmatprep.subr.mxu0 0.0
    %311 = vmatpush2.msra.mxu0 0.0
    %312 = vmatprep.subr.mxu0 0.0
    %313 = vmatpush2.msra.mxu0 0.0
    %314 = vmatprep.subr.mxu0 0.0
    %315 = vmatpush2.msra.mxu0 0.0
    %316 = vmatprep.subr.mxu0 0.0
    %317 = vmatpush2.msra.mxu0 0.0
    %318 = vmatprep.mubr.f32.mxu0 0.0
    %319 = vmatmul.mubr.f32.gmra.mxu0 %v235
    %v320 = vpop.f32.mrf.mxu0
    %v321 = vadd.f32 0.0, %v320
    %v322 = vpop.f32.mrf.mxu0
    %323 = vmatprep.mubr.f32.mxu0 0.0
    %324 = vmatmul.mubr.f32.gmra.mxu0 %v236
    %v325 = vpop.f32.mrf.mxu0
    %v326 = vadd.f32 0.0, %v325
    %v327 = vpop.f32.mrf.mxu0
    %328 = vmatprep.mubr.f32.mxu0 0.0
    %329 = vmatmul.mubr.f32.gmra.mxu0 %v237
    %v330 = vpop.f32.mrf.mxu0
    %v331 = vadd.f32 0.0, %v330
    %v332 = vpop.f32.mrf.mxu0
    %333 = vdwg.mxu0
    %vm334 = vcmp.gt.s32.totalorder %v32, 1
    %v335 = vsel %vm334, %v32, 1
    %vm336 = vcmp.gt.s32.totalorder %v33, 1
    %v337 = vsel %vm336, %v33, 1
    %vm338 = vcmp.gt.s32.totalorder %v34, 1
    %v339 = vsel %vm338, %v34, 1
    %v340 = vcvt.s32.f32 %v335
    %v341 = vcvt.s32.f32 %v337
    %v342 = vcvt.s32.f32 %v339
    %344 = vset.pattern.permute.xlu0 0
    %345 = vperm.xlu0 %344, %v340
    %v346 = vpop.permute.xlu0 %345
    %349 = vset.pattern.permute.xlu0 0
    %350 = vperm.xlu0 %349, %v341
    %v351 = vpop.permute.xlu0 %350
    %354 = vset.pattern.permute.xlu0 0
    %355 = vperm.xlu0 %354, %v342
    %v356 = vpop.permute.xlu0 %355
    %v358 = vrcp.pop %v346
    %v359 = vmul.f32 %v321, %v358
    %v360 = vrcp.pop %v351
    %v361 = vmul.f32 %v326, %v360
    %v362 = vrcp.pop %v356
    %v363 = vmul.f32 %v331, %v362
    %364 = vst [vmem:[#allocation5] sm:$0xff] %v359
    %365 = vst [vmem:[#allocation5 + $0x8] sm:$0xff] %v361
    %366 = vst [vmem:[#allocation5 + $0x10] sm:$0xff] %v363
    // Predicated region
    $region18: #{tpu_custom_call.1} parent=1 // pred_check
      _
    $region19: #{tpu_custom_call.1} parent=1 // pred_check_branch
      %368 = sbr.rel (0) target = $region21
    $region20: #{tpu_custom_call.1} parent=1 // pred_region
      %s370 = ssub.s32 384, 384
      %371 = vsyncadd [#allocation4], %s370
      %s372 = sshll.u32 [#allocation5], 4
      %s373 = int_to_ptr.vmem [resolvable:$true] %s372
      %378 = dma.vmem_to_hbm [thread:$0]  %s373, 384, %s3, [#allocation4], 128, 128, 8
    $region21: #{tpu_custom_call.1} parent=1 // pred_fallthru
      _
    // Predicated region
    $region22: #{tpu_custom_call.1} parent=1 // pred_check
      _
    $region23: #{tpu_custom_call.1} parent=1 // pred_check_branch
      %380 = sbr.rel (0) target = $region25
    $region24: #{tpu_custom_call.1} parent=1 // pred_region
      %381 = dma.done [#allocation4], 384
    $region25: #{tpu_custom_call.1} parent=1 // pred_fallthru
      _
    %382 = vsyncpa [#allocation3], 1
    %383 = vsyncpa [#allocation4], 1

</llo_original>
